<compile_context>
chip_gen: v7x
topology: tpu7x:2x2x1
jax: 0.10.0
libtpu: 0.0.40
codegen_flags: <defaults>
</compile_context>

<pallas_src>
import jax
import jax.numpy as jnp
from jax.experimental import pallas as pl
from jax.experimental.pallas import tpu as pltpu


def _soft_xent_kernel(x_ref, t_ref, o_ref, acc_ref):
    i = pl.program_id(0)

    @pl.when(i == 0)
    def _():
        acc_ref[...] = jnp.zeros_like(acc_ref)

    x = x_ref[...].astype(jnp.float32)          # (TILE_N, C)
    t = t_ref[...].astype(jnp.float32)          # (TILE_N, C)

    # numerically-stable log-sum-exp along the class axis (dim=1)
    m = jnp.max(x, axis=1, keepdims=True)                                # (TILE_N, 1)
    shifted = x - m                                                      # (TILE_N, C)
    lse = jnp.log(jnp.sum(jnp.exp(shifted), axis=1, keepdims=True))      # (TILE_N, 1)

    # fused per-row loss:
    #   -(t * (shifted - lse)).sum(1) = lse * sum(t, 1) - sum(t * shifted, 1)
    s_t = jnp.sum(t, axis=1, keepdims=True)                              # (TILE_N, 1)
    s_tx = jnp.sum(t * shifted, axis=1, keepdims=True)                   # (TILE_N, 1)
    per_row = lse * s_t - s_tx                                           # (TILE_N, 1)

    acc_ref[...] += jnp.sum(per_row, axis=0, keepdims=True)              # (1, 1)

    @pl.when(i == pl.num_programs(0) - 1)
    def _():
        o_ref[...] = acc_ref[...]


def _pick_tile_n(n, c, vmem_budget_bytes=24 * 1024 * 1024):
    """Largest TILE_N (multiple of 8) s.t. 2 inputs x 2 buffers fit the budget."""
    per_row_bytes = 2 * 2 * c * 4              # 2 inputs, double-buffered, f32
    tile = vmem_budget_bytes // max(per_row_bytes, 1)
    tile = max(8, min(1024, (tile // 8) * 8))  # clamp + sublane-align
    n_pad8 = ((n + 7) // 8) * 8
    return max(8, min(tile, n_pad8))


def soft_xent(input_, target, tile_n=None):
    """input_, target: (N, C) arrays (f32 or bf16). Returns scalar float32 loss."""
    assert input_.shape == target.shape and input_.ndim == 2
    n, c = input_.shape

    if tile_n is None:
        tile_n = _pick_tile_n(n, c)
    assert tile_n % 8 == 0 and tile_n >= 8

    # pad N up to a multiple of tile_n; zero target rows contribute exactly 0
    n_pad = pl.cdiv(n, tile_n) * tile_n
    if n_pad != n:
        pad = ((0, n_pad - n), (0, 0))
        input_ = jnp.pad(input_, pad)
        target = jnp.pad(target, pad)

    grid = (n_pad // tile_n,)

    out = pl.pallas_call(
        _soft_xent_kernel,
        out_shape=jax.ShapeDtypeStruct((1, 1), jnp.float32),
        grid_spec=pltpu.PrefetchScalarGridSpec(
            num_scalar_prefetch=0,
            grid=grid,
            in_specs=[
                pl.BlockSpec((tile_n, c), lambda i: (i, 0)),
                pl.BlockSpec((tile_n, c), lambda i: (i, 0)),
            ],
            out_specs=pl.BlockSpec((1, 1), lambda i: (0, 0)),
            scratch_shapes=[pltpu.VMEM((1, 1), jnp.float32)],
        ),
        compiler_params=pltpu.CompilerParams(
            dimension_semantics=("arbitrary",),
        ),
    )(input_, target)
    return out[0, 0]


if __name__ == "__main__":
    key = jax.random.PRNGKey(0)
    k1, k2, k3, k4 = jax.random.split(key, 4)

    # case 1: small, ragged batch (exercises zero-padding), single tile
    N1, C1 = 12, 128
    logits1 = jax.random.normal(k1, (N1, C1), dtype=jnp.float32)
    target1 = jax.nn.softmax(
        jax.random.normal(k2, (N1, C1), dtype=jnp.float32), axis=1)
    loss1 = jax.block_until_ready(soft_xent(logits1, target1))
    ref1 = -jnp.sum(target1 * jax.nn.log_softmax(logits1, axis=1))
    assert jnp.allclose(loss1, ref1, rtol=1e-5, atol=1e-5), (loss1, ref1)

    # case 2: forced small tile -> multiple grid steps (exercises accumulation)
    N2, C2 = 24, 128
    logits2 = jax.random.normal(k3, (N2, C2), dtype=jnp.float32)
    # unnormalized soft targets (sum(t) term must be kept)
    target2 = jax.random.uniform(k4, (N2, C2), dtype=jnp.float32)
    loss2 = jax.block_until_ready(soft_xent(logits2, target2, tile_n=8))
    ref2 = -jnp.sum(target2 * jax.nn.log_softmax(logits2, axis=1))
    assert jnp.allclose(loss2, ref2, rtol=1e-5, atol=1e-5), (loss2, ref2)

    print("KERNEL_OK")
</pallas_src>

<mosaic_0001>
module attributes {stable_mosaic.version = 11 : i64} {
  func.func @_soft_xent_kernel(%arg0: i32, %arg1: memref<16x128xf32, #tpu.memory_space<vmem>>, %arg2: memref<16x128xf32, #tpu.memory_space<vmem>>, %arg3: memref<1x1xf32, #tpu.memory_space<vmem>>, %arg4: memref<1x1xf32, #tpu.memory_space<vmem>>) attributes {dimension_semantics = [#tpu.dimension_semantics<arbitrary>], iteration_bounds = array<i64: 1>, scalar_prefetch = 0 : i64, scratch_operands = 1 : i64, tpu.core_type = #tpu.core_type<tc>, window_params = [{transform_indices = @transform_0, window_bounds = array<i64: 16, 128>}, {transform_indices = @transform_1, window_bounds = array<i64: 16, 128>}, {pipeline_mode = #tpu.pipeline_mode<synchronous>, transform_indices = @transform_2, window_bounds = array<i64: 1, 1>}]} {
    %c0_i32 = arith.constant 0 : i32
    %0 = arith.cmpi eq, %arg0, %c0_i32 : i32
    %1 = arith.extui %0 : i1 to i32
    %c0_i32_0 = arith.constant 0 : i32
    %2 = arith.cmpi ne, %1, %c0_i32_0 : i32
    scf.if %2 {
      %cst_14 = arith.constant 0.000000e+00 : f32
      %28 = vector.broadcast %cst_14 : f32 to vector<1x1xf32>
      %c0_15 = arith.constant 0 : index
      %c0_16 = arith.constant 0 : index
      %29 = vector.load %arg4[%c0_15, %c0_16] : memref<1x1xf32, #tpu.memory_space<vmem>>, vector<1x1xf32>
      tpu.vector_store %arg4[%c0_15, %c0_16], %28 {strides = array<i32>} : memref<1x1xf32, #tpu.memory_space<vmem>>, vector<1x1xf32>,
    } else {
    }
    %c0 = arith.constant 0 : index
    %c0_1 = arith.constant 0 : index
    %3 = vector.load %arg1[%c0, %c0_1] : memref<16x128xf32, #tpu.memory_space<vmem>>, vector<16x128xf32>
    %c0_2 = arith.constant 0 : index
    %c0_3 = arith.constant 0 : index
    %4 = vector.load %arg2[%c0_2, %c0_3] : memref<16x128xf32, #tpu.memory_space<vmem>>, vector<16x128xf32>
    %cst = arith.constant dense<0xFF800000> : vector<16xf32>
    %5 = vector.multi_reduction <maximumf>, %3, %cst [1] : vector<16x128xf32> to vector<16xf32>
    %6 = vector.shape_cast %5 : vector<16xf32> to vector<16x1xf32>
    %7 = vector.broadcast %6 : vector<16x1xf32> to vector<16x128xf32>
    %8 = arith.subf %3, %7 : vector<16x128xf32>
    %9 = math.exp %8 : vector<16x128xf32>
    %cst_4 = arith.constant dense<0.000000e+00> : vector<16xf32>
    %10 = vector.multi_reduction <add>, %9, %cst_4 [1] : vector<16x128xf32> to vector<16xf32>
    %11 = vector.shape_cast %10 : vector<16xf32> to vector<16x1xf32>
    %12 = math.log %11 : vector<16x1xf32>
    %cst_5 = arith.constant dense<0.000000e+00> : vector<16xf32>
    %13 = vector.multi_reduction <add>, %4, %cst_5 [1] : vector<16x128xf32> to vector<16xf32>
    %14 = vector.shape_cast %13 : vector<16xf32> to vector<16x1xf32>
    %15 = arith.mulf %4, %8 : vector<16x128xf32>
    %cst_6 = arith.constant dense<0.000000e+00> : vector<16xf32>
    %16 = vector.multi_reduction <add>, %15, %cst_6 [1] : vector<16x128xf32> to vector<16xf32>
    %17 = vector.shape_cast %16 : vector<16xf32> to vector<16x1xf32>
    %18 = arith.mulf %12, %14 : vector<16x1xf32>
    %19 = arith.subf %18, %17 : vector<16x1xf32>
    %c0_7 = arith.constant 0 : index
    %c0_8 = arith.constant 0 : index
    %20 = vector.load %arg4[%c0_7, %c0_8] : memref<1x1xf32, #tpu.memory_space<vmem>>, vector<1x1xf32>
    %cst_9 = arith.constant dense<0.000000e+00> : vector<1xf32>
    %21 = vector.multi_reduction <add>, %19, %cst_9 [0] : vector<16x1xf32> to vector<1xf32>
    %22 = vector.shape_cast %21 : vector<1xf32> to vector<1x1xf32>
    %23 = arith.addf %20, %22 : vector<1x1xf32>
    %c0_10 = arith.constant 0 : index
    %c0_11 = arith.constant 0 : index
    %24 = vector.load %arg4[%c0_10, %c0_11] : memref<1x1xf32, #tpu.memory_space<vmem>>, vector<1x1xf32>
    tpu.vector_store %arg4[%c0_10, %c0_11], %23 {strides = array<i32>} : memref<1x1xf32, #tpu.memory_space<vmem>>, vector<1x1xf32>,
    %c0_i32_12 = arith.constant 0 : i32
    %25 = arith.cmpi eq, %arg0, %c0_i32_12 : i32
    %26 = arith.extui %25 : i1 to i32
    %c0_i32_13 = arith.constant 0 : i32
    %27 = arith.cmpi ne, %26, %c0_i32_13 : i32
    scf.if %27 {
      %c0_14 = arith.constant 0 : index
      %c0_15 = arith.constant 0 : index
      %28 = vector.load %arg4[%c0_14, %c0_15] : memref<1x1xf32, #tpu.memory_space<vmem>>, vector<1x1xf32>
      %c0_16 = arith.constant 0 : index
      %c0_17 = arith.constant 0 : index
      %29 = vector.load %arg3[%c0_16, %c0_17] : memref<1x1xf32, #tpu.memory_space<vmem>>, vector<1x1xf32>
      tpu.vector_store %arg3[%c0_16, %c0_17], %28 {strides = array<i32>} : memref<1x1xf32, #tpu.memory_space<vmem>>, vector<1x1xf32>,
    } else {
    }
    return
  }
  func.func @transform_0(%arg0: i32) -> (i32, i32) {
    %c0_i32 = arith.constant 0 : i32
    %c0_i32_0 = arith.constant 0 : i32
    return %arg0, %c0_i32 : i32, i32
  }
  func.func @transform_1(%arg0: i32) -> (i32, i32) {
    %c0_i32 = arith.constant 0 : i32
    %c0_i32_0 = arith.constant 0 : i32
    return %arg0, %c0_i32 : i32, i32
  }
  func.func @transform_2(%arg0: i32) -> (i32, i32) {
    %c0_i32 = arith.constant 0 : i32
    %c0_i32_0 = arith.constant 0 : i32
    %c0_i32_1 = arith.constant 0 : i32
    return %c0_i32, %c0_i32_0 : i32, i32
  }
}

</mosaic_0001>

<llo_original>
// kernel: tpu_custom_call.1
$region0: #{tpu_custom_call.1}
  #allocation0 [shape = 'u32[]', space=smem, size = 0x4, offset = 0x4, fixed_abs, tag = 'smem constant byte address 0x4 - core index']
  #allocation1 [shape = 'u32[144,128]{1,0:T(1,128)}', space=vmem, size = 0x12000, scoped, tag = 'internal scratch']
  #allocation2 [shape = 'f32[1,1]{1,0:T(1,128)}', space=vmem, size = 0x200, scoped, tag = 'scratch operand']
  %s0 = inlined_call_operand.hbm [shape: f32[16,128], index: 0, kind: input, shape index: {}]
  %s1 = inlined_call_operand.hbm [shape: f32[16,128], index: 1, kind: input, shape index: {}]
  %s2 = inlined_call_operand.hbm [shape: f32[1,1], index: 2, kind: output, shape index: {}]
  %s3 = sld [smem:[#allocation0]]
  $region34: #{tpu_custom_call.1} parent=0
    _
  %s5 = ssub.s32 1, %s3
  %s6 = scalar_select 0, %s5, %s3
  $region1: #{tpu_custom_call.1} parent=0
    #allocation3 [shape = 'u8[8192]{0}', space=vmem, size = 0x2000, scoped, tag = 'input window, operand 0, single buffered']
    #allocation4 [shape = 's32[1]{0}', space=sflag, size = 0x4, scoped, tag = 'scoped memory for tpu_custom_call.1']
    #allocation5 [shape = 's32[1]{0}', space=sflag, size = 0x4, scoped, tag = 'scoped memory for tpu_custom_call.1']
    #allocation6 [shape = 'u8[8192]{0}', space=vmem, size = 0x2000, scoped, tag = 'input window, operand 1, single buffered']
    #allocation7 [shape = 's32[1]{0}', space=sflag, size = 0x4, scoped, tag = 'scoped memory for tpu_custom_call.1']
    #allocation8 [shape = 'u8[512]{0}', space=vmem, size = 0x400, scoped, tag = 'output window, operand 0, single buffered']
    %7 = vsyncpa [#allocation4], 0
    %8 = vsyncpa [#allocation7], 0
    %9 = vsyncpa [#allocation5], 0
    // Predicated region
    $region2: #{tpu_custom_call.1} parent=1 // pred_check
      _
    $region3: #{tpu_custom_call.1} parent=1 // pred_check_branch
      %11 = sbr.rel (0) target = $region5
    $region4: #{tpu_custom_call.1} parent=1 // pred_region
      %s13 = ssub.s32 256, 256
      %14 = vsyncadd [#allocation4], %s13
      %s15 = sshll.u32 [#allocation3], 4
      %s16 = int_to_ptr.vmem [resolvable:$true] %s15
      %21 = dma.hbm_to_vmem [thread:$0]  %s0, 256, %s16, [#allocation4], 128, 128, 8
    $region5: #{tpu_custom_call.1} parent=1 // pred_fallthru
      _
    // Predicated region
    $region6: #{tpu_custom_call.1} parent=1 // pred_check
      _
    $region7: #{tpu_custom_call.1} parent=1 // pred_check_branch
      %23 = sbr.rel (0) target = $region9
    $region8: #{tpu_custom_call.1} parent=1 // pred_region
      %s25 = ssub.s32 256, 256
      %26 = vsyncadd [#allocation7], %s25
      %s27 = sshll.u32 [#allocation6], 4
      %s28 = int_to_ptr.vmem [resolvable:$true] %s27
      %33 = dma.hbm_to_vmem [thread:$0]  %s1, 256, %s28, [#allocation7], 128, 128, 8
    $region9: #{tpu_custom_call.1} parent=1 // pred_fallthru
      _
    // Predicated region
    $region10: #{tpu_custom_call.1} parent=1 // pred_check
      _
    $region11: #{tpu_custom_call.1} parent=1 // pred_check_branch
      %35 = sbr.rel (0) target = $region13
    $region12: #{tpu_custom_call.1} parent=1 // pred_region
      %36 = dma.done [#allocation4], 256
    $region13: #{tpu_custom_call.1} parent=1 // pred_fallthru
      _
    // Predicated region
    $region14: #{tpu_custom_call.1} parent=1 // pred_check
      _
    $region15: #{tpu_custom_call.1} parent=1 // pred_check_branch
      %38 = sbr.rel (0) target = $region17
    $region16: #{tpu_custom_call.1} parent=1 // pred_region
      %39 = dma.done [#allocation7], 256
    $region17: #{tpu_custom_call.1} parent=1 // pred_fallthru
      _
    %p40 = scmp.eq.s32.totalorder 0, 0
    // Predicated region
    $region18: #{tpu_custom_call.1} parent=1 // pred_check
      %p41 = pneg %p40
    $region19: #{tpu_custom_call.1} parent=1 // pred_check_branch
      %43 = sbr.rel (%p41) target = $region21
    $region20: #{tpu_custom_call.1} parent=1 // pred_region
      %vm44 = vcmask 0
      %45 = vst.msk [vmem:[#allocation2] sm:$0x1] %vm44, 0.0
    $region21: #{tpu_custom_call.1} parent=1 // pred_fallthru
      _
    %v46 = vld [vmem:[#allocation3] sm:$0xff]
    %v47 = vld [vmem:[#allocation3 + $0x8] sm:$0xff]
    %v48 = vld [vmem:[#allocation6] sm:$0xff]
    %v49 = vld [vmem:[#allocation6 + $0x8] sm:$0xff]
    %50 = vmax.xlane.f32.xlu0 %v46
    %v51 = vpop.xlane.xlu0 %50
    %52 = vmax.xlane.f32.xlu0 %v47
    %v53 = vpop.xlane.xlu0 %52
    %v54 = vsub.f32 %v46, %v51
    %v55 = vsub.f32 %v47, %v53
    %v56 = vmul.f32 %v54, 1.442695
    %v57 = vpow.pop %v56
    %v58 = vmul.f32 %v55, 1.442695
    %v59 = vpow.pop %v58
    %60 = vadd.xlane.f32.xlu0 %v57
    %v61 = vpop.xlane.xlu0 %60
    %62 = vadd.xlane.f32.xlu0 %v59
    %v63 = vpop.xlane.xlu0 %62
    %v64 = vlog2.pop %v61
    %v65 = vmul.f32 %v64, 0.6931472
    %v66 = vlog2.pop %v63
    %v67 = vmul.f32 %v66, 0.6931472
    %68 = vadd.xlane.f32.xlu0 %v48
    %v69 = vpop.xlane.xlu0 %68
    %70 = vadd.xlane.f32.xlu0 %v49
    %v71 = vpop.xlane.xlu0 %70
    %v72 = vmul.f32 %v48, %v54
    %v73 = vmul.f32 %v49, %v55
    %74 = vadd.xlane.f32.xlu0 %v72
    %v75 = vpop.xlane.xlu0 %74
    %76 = vadd.xlane.f32.xlu0 %v73
    %v77 = vpop.xlane.xlu0 %76
    %v78 = vmul.f32 %v65, %v69
    %v79 = vmul.f32 %v67, %v71
    %v80 = vsub.f32 %v78, %v75
    %v81 = vsub.f32 %v79, %v77
    %v82 = vld [vmem:[#allocation2] sm:$0x1]
    %v83 = vadd.f32 %v80, %v81
    %v84 = vrot.slane %v83, 4
    %v85 = vadd.f32 %v83, %v84
    %v86 = vrot.slane %v85, 2
    %v87 = vadd.f32 %v85, %v86
    %v88 = vrot.slane %v87, 1
    %v89 = vadd.f32 %v87, %v88
    %v90 = vadd.f32 %v82, %v89
    %vm91 = vcmask 0
    %92 = vst.msk [vmem:[#allocation2] sm:$0x1] %vm91, %v90
    // Predicated region
    $region22: #{tpu_custom_call.1} parent=1 // pred_check
      %p93 = pneg %p40
    $region23: #{tpu_custom_call.1} parent=1 // pred_check_branch
      %95 = sbr.rel (%p93) target = $region25
    $region24: #{tpu_custom_call.1} parent=1 // pred_region
      %v96 = vld [vmem:[#allocation2] sm:$0x1]
      %97 = vst.msk [vmem:[#allocation8] sm:$0x1] %vm91, %v96
    $region25: #{tpu_custom_call.1} parent=1 // pred_fallthru
      _
    // Predicated region
    $region26: #{tpu_custom_call.1} parent=1 // pred_check
      _
    $region27: #{tpu_custom_call.1} parent=1 // pred_check_branch
      %99 = sbr.rel (0) target = $region29
    $region28: #{tpu_custom_call.1} parent=1 // pred_region
      %s101 = ssub.s32 16, 16
      %102 = vsyncadd [#allocation5], %s101
      %s104 = sshll.u32 [#allocation8], 4
      %s105 = int_to_ptr.vmem [resolvable:$true] %s104
      %107 = dma.vmem_to_hbm [thread:$0]  %s105, 16, %s2, [#allocation5]
    $region29: #{tpu_custom_call.1} parent=1 // pred_fallthru
      _
    // Predicated region
    $region30: #{tpu_custom_call.1} parent=1 // pred_check
      _
    $region31: #{tpu_custom_call.1} parent=1 // pred_check_branch
      %109 = sbr.rel (0) target = $region33
    $region32: #{tpu_custom_call.1} parent=1 // pred_region
      %110 = dma.done [#allocation5], 16
    $region33: #{tpu_custom_call.1} parent=1 // pred_fallthru
      _
    %111 = vsyncpa [#allocation4], 1
    %112 = vsyncpa [#allocation7], 1
    %113 = vsyncpa [#allocation5], 1

</llo_original>
